<compile_context>
chip_gen: v7x
topology: tpu7x:2x2x1
jax: 0.10.0
libtpu: 0.0.40
codegen_flags: <defaults>
</compile_context>

<pallas_src>
import jax
import jax.numpy as jnp
from jax.experimental import pallas as pl
from jax.experimental.pallas import tpu as pltpu


def _drop_path_kernel(mask_ref, x_ref, o_ref):
    # mask_ref: SMEM (B,) f32 keep/scale factor per sample (scalar prefetch).
    # x_ref / o_ref: VMEM tile (1, t1, *trailing dims) of the current sample.
    b = pl.program_id(0)
    m = mask_ref[b].astype(x_ref.dtype)     # one scalar cast; native-dtype multiply
    o_ref[...] = x_ref[...] * m


def _sublane_multiple(dtype) -> int:
    # 8 for f32, 16 for bf16, 32 for int8/fp8 (dtype-aware packing).
    return max(8, 32 // jnp.dtype(dtype).itemsize)


def _target_block_bytes() -> int:
    """Per-block byte target, chip-aware (safe fallback = 2 MiB)."""
    try:
        vmem = pltpu.get_tpu_info().vmem_capacity_bytes
    except Exception:
        vmem = None
    if vmem is not None and vmem <= (64 << 20):
        # v7x: 64 MiB VMEM / 3.2 TB/s HBM -> 4 MiB blocks cut per-step
        # overhead to ~5%; 4 buffers = 16 MiB < 32 MiB scoped default.
        return 4 << 20
    # v5e / v6e (128 MiB VMEM): 2 MiB blocks (8 MiB total buffers) fit the
    # v5e 16 MiB scoped-VMEM default and sit at ~85-86% of HBM roofline.
    return 2 << 20


def drop_path_pallas(x, key, drop_prob: float = 0.0, training: bool = False,
                     scale_by_keep: bool = True, in_place: bool = False):
    """Pallas equivalent of timm-style drop_path on an N-D (batch-leading) tensor."""
    if drop_prob == 0.0 or not training:
        return x

    keep_prob = 1.0 - drop_prob
    B = x.shape[0]

    # Per-sample bernoulli keep mask (tiny: B scalars) — glue in plain JAX.
    mask = jax.random.bernoulli(key, p=keep_prob, shape=(B,)).astype(jnp.float32)
    if keep_prob > 0.0 and scale_by_keep:
        mask = mask / keep_prob

    if x.ndim <= 1 or x.size == 0:
        # Nothing worth a kernel: per-sample scalar multiply.
        return x * mask.astype(x.dtype).reshape((B,) + (1,) * (x.ndim - 1))

    orig_shape = x.shape
    # Rank-2 inputs get a free size-1 middle dim (minor dim unchanged -> no relayout).
    xk = x.reshape(B, 1, x.shape[1]) if x.ndim == 2 else x
    shape = xk.shape
    ndim = xk.ndim
    d1 = shape[1]
    trailing = 1
    for d in shape[2:]:
        trailing *= d
    itemsize = jnp.dtype(x.dtype).itemsize
    trailing_bytes = max(1, trailing * itemsize)

    # Sublane alignment only matters when the tiled axis is the second-to-last
    # dim (rank-3): non-full blocks there must be a multiple of the packed
    # sublane count.  For rank>=4 the tiled axis is a leading dim (any size ok).
    s_req = _sublane_multiple(x.dtype) if ndim == 3 else None

    def _align(t):
        t = max(1, min(t, d1))
        if s_req is None or t == d1:
            return t
        t = (t // s_req) * s_req
        return t if t > 0 else d1

    target_bytes = _target_block_bytes()
    t1 = _align(target_bytes // trailing_bytes)

    # Megacore guard (v7x): keep B * n_tiles >= 8 where possible, but never
    # shrink blocks below ~256 KiB (per-step overhead would dominate).
    while B * (-(-d1 // t1)) < 8:
        cand = _align(t1 // 2)
        if cand >= t1 or cand * trailing_bytes < (256 << 10):
            break
        t1 = cand

    n_tiles = -(-d1 // t1)
    block_bytes = t1 * trailing_bytes
    n_rest = ndim - 2
    block_shape = (1, t1) + shape[2:]   # full-extent trailing dims -> legal, no reslab

    def _idx(b, t, _mask_ref):          # scalar-prefetch ref is passed positionally
        return (b, t) + (0,) * n_rest

    kwargs = {}
    if in_place:
        # Arg 0 is the scalar-prefetch mask; arg 1 (x) aliases output 0.
        # Only a real win when the caller donates x (jit donate_argnums);
        # otherwise XLA inserts a copy-before-call.
        kwargs["input_output_aliases"] = {1: 0}

    out = pl.pallas_call(
        _drop_path_kernel,
        out_shape=jax.ShapeDtypeStruct(shape, x.dtype),
        grid_spec=pltpu.PrefetchScalarGridSpec(
            num_scalar_prefetch=1,
            grid=(B, n_tiles),
            in_specs=[pl.BlockSpec(block_shape, _idx)],
            out_specs=pl.BlockSpec(block_shape, _idx),
        ),
        compiler_params=pltpu.CompilerParams(
            dimension_semantics=("parallel", "parallel"),
            vmem_limit_bytes=int(min(max(4 * block_bytes + (4 << 20), 16 << 20),
                                     64 << 20)),
        ),
        **kwargs,
    )(mask, xk)

    return out.reshape(orig_shape) if out.shape != orig_shape else out


class DropPath:
    """Drop paths (Stochastic Depth) per sample — Pallas TPU implementation."""

    def __init__(self, drop_prob: float = 0.0, scale_by_keep: bool = True,
                 in_place: bool = False):
        self.drop_prob = drop_prob
        self.scale_by_keep = scale_by_keep
        self.in_place = in_place
        self.training = True  # mirror nn.Module default training mode

    def __call__(self, x, key):
        return drop_path_pallas(x, key, self.drop_prob, self.training,
                                self.scale_by_keep, in_place=self.in_place)

    def extra_repr(self):
        return f"drop_prob={round(self.drop_prob, 3):0.3f}"


if __name__ == "__main__":
    key = jax.random.PRNGKey(0)
    k_x, k_mask, k_x2, k_x3 = jax.random.split(key, 4)

    # NCHW input: batch=2, channels=4, spatial=16x16
    x = jax.random.normal(k_x, (2, 4, 16, 16), dtype=jnp.float32)

    module = DropPath(drop_prob=0.25, scale_by_keep=True)
    module.training = True
    out = jax.block_until_ready(module(x, k_mask))

    # reference (pure JAX) with the same mask draw
    keep_prob = 1.0 - module.drop_prob
    ref_mask = jax.random.bernoulli(k_mask, p=keep_prob, shape=(2,)).astype(jnp.float32)
    ref_mask_scaled = ref_mask / keep_prob
    ref = x * ref_mask_scaled.reshape(2, 1, 1, 1)
    assert out.shape == x.shape and out.dtype == x.dtype
    assert jnp.allclose(out, ref, atol=1e-6), "mismatch vs reference (f32 NCHW)"

    # bf16 + odd spatial dims exercises full-extent trailing-dim blocks (no padding path)
    x_odd = jax.random.normal(k_x2, (2, 3, 7, 5), dtype=jnp.bfloat16)
    out_odd = jax.block_until_ready(module(x_odd, k_mask))
    ref_odd = x_odd * ref_mask_scaled.astype(jnp.bfloat16).reshape(2, 1, 1, 1)
    assert out_odd.shape == x_odd.shape and out_odd.dtype == x_odd.dtype
    assert jnp.allclose(out_odd.astype(jnp.float32), ref_odd.astype(jnp.float32),
                        atol=1e-2), "mismatch vs reference (bf16 odd shape)"

    # rank-2 input (B, D)
    x2d = jax.random.normal(k_x3, (2, 32), dtype=jnp.float32)
    out2d = jax.block_until_ready(module(x2d, k_mask))
    ref2d = x2d * ref_mask_scaled.reshape(2, 1)
    assert out2d.shape == x2d.shape
    assert jnp.allclose(out2d, ref2d, atol=1e-6), "mismatch vs reference (rank-2)"

    # opt-in aliased-output (in-place style) path
    out_ip = jax.block_until_ready(
        drop_path_pallas(x, k_mask, 0.25, True, True, in_place=True))
    assert jnp.allclose(out_ip, ref, atol=1e-6), "mismatch vs reference (in_place)"

    # eval mode / drop_prob=0 -> identity (no kernel launch), same as PyTorch
    module.training = False
    out_eval = jax.block_until_ready(module(x, k_mask))
    assert jnp.array_equal(out_eval, x)

    print("KERNEL_OK")
</pallas_src>

<mosaic_0001>
module attributes {stable_mosaic.version = 11 : i64} {
  func.func @_drop_path_kernel(%arg0: i32, %arg1: i32, %arg2: memref<2xf32, #tpu.memory_space<smem>>, %arg3: memref<1x4x16x16xf32, #tpu.memory_space<vmem>>, %arg4: memref<1x4x16x16xf32, #tpu.memory_space<vmem>>) attributes {dimension_semantics = [#tpu.dimension_semantics<parallel>, #tpu.dimension_semantics<parallel>], iteration_bounds = array<i64: 2, 1>, scalar_prefetch = 1 : i64, scratch_operands = 0 : i64, tpu.core_type = #tpu.core_type<tc>, window_params = [{transform_indices = @transform_0, window_bounds = array<i64: 1, 4, 16, 16>}, {transform_indices = @transform_1, window_bounds = array<i64: 1, 4, 16, 16>}]} {
    %0 = arith.index_cast %arg0 : i32 to index
    %1 = memref.load %arg2[%0] : memref<2xf32, #tpu.memory_space<smem>>
    %c0 = arith.constant 0 : index
    %c0_0 = arith.constant 0 : index
    %c0_1 = arith.constant 0 : index
    %c0_2 = arith.constant 0 : index
    %2 = vector.load %arg3[%c0, %c0_0, %c0_1, %c0_2] : memref<1x4x16x16xf32, #tpu.memory_space<vmem>>, vector<1x4x16x16xf32>
    %3 = vector.broadcast %1 : f32 to vector<1x4x16x16xf32>
    %4 = arith.mulf %2, %3 : vector<1x4x16x16xf32>
    %c0_3 = arith.constant 0 : index
    %c0_4 = arith.constant 0 : index
    %c0_5 = arith.constant 0 : index
    %c0_6 = arith.constant 0 : index
    %5 = vector.load %arg4[%c0_3, %c0_4, %c0_5, %c0_6] : memref<1x4x16x16xf32, #tpu.memory_space<vmem>>, vector<1x4x16x16xf32>
    tpu.vector_store %arg4[%c0_3, %c0_4, %c0_5, %c0_6], %4 {strides = array<i32>} : memref<1x4x16x16xf32, #tpu.memory_space<vmem>>, vector<1x4x16x16xf32>,
    return
  }
  func.func @transform_0(%arg0: i32, %arg1: i32, %arg2: memref<2xf32, #tpu.memory_space<smem>>) -> (i32, i32, i32, i32) {
    %c0_i32 = arith.constant 0 : i32
    %c0_i32_0 = arith.constant 0 : i32
    %c0_i32_1 = arith.constant 0 : i32
    return %arg0, %arg1, %c0_i32, %c0_i32_0 : i32, i32, i32, i32
  }
  func.func @transform_1(%arg0: i32, %arg1: i32, %arg2: memref<2xf32, #tpu.memory_space<smem>>) -> (i32, i32, i32, i32) {
    %c0_i32 = arith.constant 0 : i32
    %c0_i32_0 = arith.constant 0 : i32
    %c0_i32_1 = arith.constant 0 : i32
    return %arg0, %arg1, %c0_i32, %c0_i32_0 : i32, i32, i32, i32
  }
}

</mosaic_0001>

<llo_original>
// kernel: tpu_custom_call.1
$region0: #{tpu_custom_call.1}
  #allocation0 [shape = 'u32[]', space=smem, size = 0x4, offset = 0x4, fixed_abs, tag = 'smem constant byte address 0x4 - core index']
  #allocation1 [shape = 'u32[144,128]{1,0:T(1,128)}', space=vmem, size = 0x12000, scoped, tag = 'internal scratch']
  #allocation2 [shape = 's32[1]{0}', space=sflag, size = 0x4, scoped, tag = 'scoped memory for tpu_custom_call.1']
  #allocation3 [shape = 'u8[512]{0}', space=smem, size = 0x200, scoped, tag = 'prefetched SMEM operand 0']
  %s0 = inlined_call_operand.hbm [shape: f32[2], index: 0, kind: input, shape index: {}]
  %s1 = inlined_call_operand.hbm [shape: f32[2,4,16,16], index: 1, kind: input, shape index: {}]
  %s2 = inlined_call_operand.hbm [shape: f32[2,4,16,16], index: 2, kind: output, shape index: {}]
  %s3 = sld [smem:[#allocation0]]
  $region41: #{tpu_custom_call.1} parent=0
    _
  %s5 = ssub.s32 1, %s3
  %s6 = scalar_select 0, %s5, %s3
  %8 = dma.hbm_to_smem %s0, 16, [#allocation3], [#allocation2]
  %9 = dma.done [#allocation2], 16
  %10 = sfence
  $region1: #{tpu_custom_call.1} parent=0
    #allocation4 [shape = 'u8[65536]{0}', space=vmem, size = 0x10000, scoped, tag = 'input window, operand 1']
    #allocation5 [shape = 's32[2]{0}', space=sflag, size = 0x8, scoped, tag = 'scoped memory for tpu_custom_call.1']
    #allocation6 [shape = 's32[2]{0}', space=sflag, size = 0x8, scoped, tag = 'scoped memory for tpu_custom_call.1']
    #allocation7 [shape = 'u8[65536]{0}', space=vmem, size = 0x10000, scoped, tag = 'output window, operand 0']
    %11 = vsyncpa [#allocation5], 0
    %s12 = scalar_lea.sflag [#allocation5], 1
    %13 = vsyncpa %s12, 0
    %14 = vsyncpa [#allocation6], 0
    %s15 = scalar_lea.sflag [#allocation6], 1
    %16 = vsyncpa %s15, 0
    loop: start=0, step=1, limit=4
    $region2: #{tpu_custom_call.1} parent=1 // loop_pre_header
      _
    $region3: #{tpu_custom_call.1} parent=1 // loop_header
      %s18 = sphi 0, %s22
      %p19 = scmp.ge.s32.totalorder %s18, 4
      %s25 = sphi 0, %s37
      %s26 = sphi 0, %s33
      %s27 = sphi 0, %s25
      %s28 = sphi 0, %s26
      %s29 = sphi 0, %s27
      %s30 = sphi 0, %s28
      %s42 = sphi 0, %s44
      %s45 = sphi 0, %s42
      %s46 = sphi 0, %s45
      %s62 = sphi 0, %s46
      %s70 = sphi 0, %s72
      %s73 = sphi 0, %s70
      %s74 = sphi 0, %s73
      %s90 = sphi 0, %s74
    $region4: #{tpu_custom_call.1} parent=1 // loop_header_branch
      %21 = sbr.rel (%p19) target = $region8
    $region5: #{tpu_custom_call.1} parent=1 // loop_body
      %s23 = ssub.s32 %s18, 1
      %s24 = ssub.s32 %s18, 2
      %s31 = sadd.s32 1, %s26
      %p32 = scmp.ge.s32.totalorder %s31, 1
      %s33 = scalar_select %p32, 0, %s31
      %s34 = sadd.s32 1, %s25
      %s35 = scalar_select %p32, %s34, %s25
      %p36 = scmp.ge.s32.totalorder %s35, 2
      %s37 = scalar_select %p36, 0, %s35
      %s38 = ssub.s32 %s25, %s37
      %s39 = ssub.s32 %s26, %s33
      %s40 = sor.u32 %s38, %s39
      %p41 = scmp.eq.s32.totalorder %s40, 0
      %s43 = sadd.s32 %s42, 1
      %s44 = scalar_select %p41, %s42, %s43
      %p47 = pneg %p41
      %p48 = scmp.eq.s32.totalorder %s18, 1
      %p49 = por %p47, %p48
      %p50 = scmp.ne.s32.totalorder %s42, %s45
      %p51 = scmp.eq.s32.totalorder %s18, 0
      %p52 = por %p50, %p51
      %p53 = scmp.ne.s32.totalorder %s42, %s45
      %p54 = scmp.eq.s32.totalorder %s23, 1
      %p55 = por %p53, %p54
      %p56 = scmp.ne.s32.totalorder %s45, %s46
      %p57 = scmp.eq.s32.totalorder %s23, 0
      %p58 = por %p56, %p57
      %p59 = scmp.ne.s32.totalorder %s45, %s46
      %p60 = scmp.eq.s32.totalorder %s24, 1
      %p61 = por %p59, %p60
      %p63 = scmp.ne.s32.totalorder %s46, %s62
      %p64 = scmp.eq.s32.totalorder %s24, 0
      %p65 = por %p63, %p64
      %s66 = ssub.s32 %s25, %s37
      %s67 = ssub.s32 %s26, %s33
      %s68 = sor.u32 %s66, %s67
      %p69 = scmp.eq.s32.totalorder %s68, 0
      %s71 = sadd.s32 %s70, 1
      %s72 = scalar_select %p69, %s70, %s71
      %p75 = pneg %p69
      %p76 = scmp.eq.s32.totalorder %s18, 1
      %p77 = por %p75, %p76
      %p78 = scmp.ne.s32.totalorder %s70, %s73
      %p79 = scmp.eq.s32.totalorder %s18, 0
      %p80 = por %p78, %p79
      %p81 = scmp.ne.s32.totalorder %s70, %s73
      %p82 = scmp.eq.s32.totalorder %s23, 1
      %p83 = por %p81, %p82
      %p84 = scmp.ne.s32.totalorder %s73, %s74
      %p85 = scmp.eq.s32.totalorder %s23, 0
      %p86 = por %p84, %p85
      %p87 = scmp.ne.s32.totalorder %s73, %s74
      %p88 = scmp.eq.s32.totalorder %s24, 1
      %p89 = por %p87, %p88
      %p91 = scmp.ne.s32.totalorder %s74, %s90
      %p92 = scmp.eq.s32.totalorder %s24, 0
      %p93 = por %p91, %p92
      %p94 = scmp.le.s32.totalorder 1, %s18
      %p95 = scmp.lt.s32.totalorder %s18, 3
      %p96 = pnand %p94, %p95
      %p97 = pneg %p96
      // Predicated region
      $region9: #{tpu_custom_call.1} parent=5 // pred_check
        _
      $region10: #{tpu_custom_call.1} parent=5 // pred_check_branch
        %99 = sbr.rel (%p96) target = $region12
      $region11: #{tpu_custom_call.1} parent=5 // pred_region
        %s100 = ssub.s32 %s18, 1
      $region12: #{tpu_custom_call.1} parent=5 // pred_fallthru
        _
      %p101 = scmp.lt.s32.totalorder %s18, 2
      // Predicated region
      $region13: #{tpu_custom_call.1} parent=5 // pred_check
        %p102 = pneg %p101
      $region14: #{tpu_custom_call.1} parent=5 // pred_check_branch
        %104 = sbr.rel (%p102) target = $region16
      $region15: #{tpu_custom_call.1} parent=5 // pred_region
        // Predicated region
        $region17: #{tpu_custom_call.1} parent=15 // pred_check
          %p105 = pneg %p52
        $region18: #{tpu_custom_call.1} parent=15 // pred_check_branch
          %107 = sbr.rel (%p105) target = $region20
        $region19: #{tpu_custom_call.1} parent=15 // pred_region
          %s108 = sand.u32 %s42, 1
          %s109 = scalar_lea.sflag [#allocation5], %s108
          %s110 = sand.u32 %s42, 1
          %s111 = smul.addr %s110, 64
          %s112 = scalar_lea.vmem [#allocation4], %s111
          %s113 = smul.u32 4, %s26
          %s115 = ssub.s32 1024, 1024
          %116 = vsyncadd %s109, %s115
          %s117 = smul.addr %s113, 2
          %s118 = smul.addr %s25, 8
          %s119 = sadd.s32 %s117, %s118
          %s120 = smul.addr %s119, 128
          %s121 = scalar_lea.hbm %s1, %s120
          %s122 = sshll.u32 %s112, 4
          %s123 = int_to_ptr.vmem [resolvable:$true] %s122
          %128 = dma.hbm_to_vmem [thread:$0]  %s121, 1024, %s123, %s109, 128, 128, 8
        $region20: #{tpu_custom_call.1} parent=15 // pred_fallthru
          _
      $region16: #{tpu_custom_call.1} parent=5 // pred_fallthru
        _
      %p129 = scmp.le.s32.totalorder 1, %s18
      %p130 = scmp.lt.s32.totalorder %s18, 3
      %p131 = pnand %p129, %p130
      %p132 = pneg %p131
      // Predicated region
      $region21: #{tpu_custom_call.1} parent=5 // pred_check
        _
      $region22: #{tpu_custom_call.1} parent=5 // pred_check_branch
        %134 = sbr.rel (%p131) target = $region24
      $region23: #{tpu_custom_call.1} parent=5 // pred_region
        %s135 = ssub.s32 %s18, 1
        %s136 = sand.u32 %s45, 1
        %s137 = scalar_lea.sflag [#allocation5], %s136
        %s138 = sand.u32 %s45, 1
        %s139 = smul.addr %s138, 64
        %s140 = scalar_lea.vmem [#allocation4], %s139
        // Predicated region
        $region25: #{tpu_custom_call.1} parent=23 // pred_check
          %p141 = pneg %p58
        $region26: #{tpu_custom_call.1} parent=23 // pred_check_branch
          %143 = sbr.rel (%p141) target = $region28
        $region27: #{tpu_custom_call.1} parent=23 // pred_region
          %144 = dma.done %s137, 1024
        $region28: #{tpu_custom_call.1} parent=23 // pred_fallthru
          _
        %s145 = sand.u32 %s45, 1
        %s146 = scalar_lea.sflag [#allocation5], %s145
        %s147 = sand.u32 %s45, 1
        %s148 = smul.addr %s147, 64
        %s149 = scalar_lea.vmem [#allocation4], %s148
        %p150 = pneg %p58
        %p151 = pneg %p55
        %p152 = pneg %p86
        %p153 = pneg %p83
        %s154 = sand.u32 %s73, 1
        %s155 = scalar_lea.sflag [#allocation6], %s154
        %s156 = sand.u32 %s73, 1
        %s157 = smul.addr %s156, 64
        %s158 = scalar_lea.vmem [#allocation7], %s157
        %s159 = smul.u32 4, %s28
        %s160 = smul.u32 4, %s28
        %s161 = sld [smem:[#allocation3 + %s27]]
        %v162 = vld [vmem:[%s140] sm:$0xff]
        %v163 = vld [vmem:[%s140 + $0x8] sm:$0xff]
        %v164 = vld [vmem:[%s140 + $0x10] sm:$0xff]
        %v165 = vld [vmem:[%s140 + $0x18] sm:$0xff]
        %v166 = vld [vmem:[%s140 + $0x20] sm:$0xff]
        %v167 = vld [vmem:[%s140 + $0x28] sm:$0xff]
        %v168 = vld [vmem:[%s140 + $0x30] sm:$0xff]
        %v169 = vld [vmem:[%s140 + $0x38] sm:$0xff]
        %v170 = vstv %s161
        %v171 = vmul.f32 %v162, %v170
        %v172 = vmul.f32 %v163, %v170
        %v173 = vmul.f32 %v164, %v170
        %v174 = vmul.f32 %v165, %v170
        %v175 = vmul.f32 %v166, %v170
        %v176 = vmul.f32 %v167, %v170
        %v177 = vmul.f32 %v168, %v170
        %v178 = vmul.f32 %v169, %v170
        %vm179 = vcmask 130048
        %180 = vst.msk [vmem:[%s158] sm:$0xff] %vm179, %v171
        %181 = vst.msk [vmem:[%s158 + $0x8] sm:$0xff] %vm179, %v172
        %182 = vst.msk [vmem:[%s158 + $0x10] sm:$0xff] %vm179, %v173
        %183 = vst.msk [vmem:[%s158 + $0x18] sm:$0xff] %vm179, %v174
        %184 = vst.msk [vmem:[%s158 + $0x20] sm:$0xff] %vm179, %v175
        %185 = vst.msk [vmem:[%s158 + $0x28] sm:$0xff] %vm179, %v176
        %186 = vst.msk [vmem:[%s158 + $0x30] sm:$0xff] %vm179, %v177
        %187 = vst.msk [vmem:[%s158 + $0x38] sm:$0xff] %vm179, %v178
        %s188 = sand.u32 %s73, 1
        %s189 = scalar_lea.sflag [#allocation6], %s188
        %s190 = sand.u32 %s73, 1
        %s191 = smul.addr %s190, 64
        %s192 = scalar_lea.vmem [#allocation7], %s191
        // Predicated region
        $region29: #{tpu_custom_call.1} parent=23 // pred_check
          %p193 = pneg %p83
        $region30: #{tpu_custom_call.1} parent=23 // pred_check_branch
          %195 = sbr.rel (%p193) target = $region32
        $region31: #{tpu_custom_call.1} parent=23 // pred_region
          %s196 = smul.u32 4, %s28
          %s198 = ssub.s32 1024, 1024
          %199 = vsyncadd %s189, %s198
          %s200 = smul.addr %s196, 2
          %s201 = smul.addr %s27, 8
          %s202 = sadd.s32 %s200, %s201
          %s203 = smul.addr %s202, 128
          %s204 = scalar_lea.hbm %s2, %s203
          %s205 = sshll.u32 %s192, 4
          %s206 = int_to_ptr.vmem [resolvable:$true] %s205
          %211 = dma.vmem_to_hbm [thread:$0]  %s206, 1024, %s204, %s189, 128, 128, 8
        $region32: #{tpu_custom_call.1} parent=23 // pred_fallthru
          _
      $region24: #{tpu_custom_call.1} parent=5 // pred_fallthru
        _
      %p212 = scmp.le.s32.totalorder 2, %s18
      // Predicated region
      $region33: #{tpu_custom_call.1} parent=5 // pred_check
        %p213 = pneg %p212
      $region34: #{tpu_custom_call.1} parent=5 // pred_check_branch
        %215 = sbr.rel (%p213) target = $region36
      $region35: #{tpu_custom_call.1} parent=5 // pred_region
        %s216 = ssub.s32 %s18, 2
        // Predicated region
        $region37: #{tpu_custom_call.1} parent=35 // pred_check
          %p217 = pneg %p89
        $region38: #{tpu_custom_call.1} parent=35 // pred_check_branch
          %219 = sbr.rel (%p217) target = $region40
        $region39: #{tpu_custom_call.1} parent=35 // pred_region
          %s220 = sand.u32 %s74, 1
          %s221 = scalar_lea.sflag [#allocation6], %s220
          %s222 = sand.u32 %s74, 1
          %s223 = smul.addr %s222, 64
          %s224 = scalar_lea.vmem [#allocation7], %s223
          %225 = dma.done %s221, 1024
        $region40: #{tpu_custom_call.1} parent=35 // pred_fallthru
          _
      $region36: #{tpu_custom_call.1} parent=5 // pred_fallthru
        _
    $region6: #{tpu_custom_call.1} parent=1 // loop_footer
      %s22 = sadd.s32 1, %s18
    $region7: #{tpu_custom_call.1} parent=1 // loop_footer_branch
      %17 = sbr.rel target = $region3
    $region8: #{tpu_custom_call.1} parent=1 // loop_exit
      _
    %226 = vsyncpa [#allocation5], 1
    %s227 = scalar_lea.sflag [#allocation5], 1
    %228 = vsyncpa %s227, 1
    %229 = vsyncpa [#allocation6], 1
    %s230 = scalar_lea.sflag [#allocation6], 1
    %231 = vsyncpa %s230, 1

</llo_original>
